<compile_context>
chip_gen: v7x
topology: tpu7x:2x2x1
jax: 0.10.0
libtpu: 0.0.40
codegen_flags: <defaults>
</compile_context>

<pallas_src>
import functools

import jax
import jax.numpy as jnp
from jax.experimental import pallas as pl
from jax.experimental.pallas import tpu as pltpu

ALPHA, BETA, SCALE_POS, SCALE_NEG = 0.6, 0.4, 10.0, 40.0


def _loss_kernel(emb_ref, proj_ref, norm_ref, sim_ref, lbl_ref, out_ref,
                 m_sc, s_sc, tgt_sc, *, c_real, padded):
    """Grid axis 0 tiles the (padded) class dimension C (reduction -> 'arbitrary')."""
    ci = pl.program_id(0)
    nc = pl.num_programs(0)

    emb = emb_ref[...]                          # (2B, D) f32, resident across steps
    labels = lbl_ref[...]                       # (2B, 1) i32, resident
    two_b = emb.shape[0]
    b = two_b // 2
    tile_c = proj_ref.shape[1]
    inv_b = 1.0 / b

    # ---------------- step 0: init accumulators + align losses --------------
    @pl.when(ci == 0)
    def _():
        m_sc[...] = jnp.full_like(m_sc, -jnp.inf)
        s_sc[...] = jnp.zeros_like(s_sc)
        tgt_sc[...] = jnp.zeros_like(tgt_sc)

        # global / local align losses here so they overlap the prefetch DMA of
        # projection tile 1 instead of being pure tail latency on the last step.
        emb_n = emb * jax.lax.rsqrt(jnp.sum(emb * emb, axis=1, keepdims=True))
        vis_n = emb_n[:b]                                        # (B, D)
        txt_n = emb_n[b:]                                        # (B, D)
        gsim = jax.lax.dot_general(                              # vis_n @ txt_n.T
            vis_n, txt_n,
            dimension_numbers=(((1,), (1,)), ((), ())),
            preferred_element_type=jnp.float32)                  # (B, B)

        lbl_b = labels[:b]                                       # (B, 1)
        pos = lbl_b == lbl_b.T                                   # (B, B) bool

        def _align(s):
            # select the branch argument first, then one stable softplus/elem
            x = jnp.where(pos, -SCALE_POS * (s - ALPHA), SCALE_NEG * (s - BETA))
            sp = jnp.maximum(x, 0.0) + jnp.log1p(jnp.exp(-jnp.abs(x)))
            return jnp.sum(sp) * 2.0 * inv_b

        glob = _align(gsim)
        loc = _align(sim_ref[...])

        # stash glob/loc in the resident (1, 3) output block (it is only
        # written back to HBM once, after the final grid step).
        idx = jax.lax.broadcasted_iota(jnp.int32, (1, 3), 1)
        out_ref[...] = jnp.where(idx == 1, glob, jnp.where(idx == 2, loc, 0.0))

    # ---------------- instance loss: online logsumexp over class tiles ------
    # bf16 x bf16 MXU matmul, f32 accumulation; F.normalize(proj, dim=0) is
    # applied by scaling the (2B, TILE_C) logits with the precomputed f32
    # inverse column norms (much cheaper than scaling the (D, TILE_C) tile).
    logits = jnp.dot(emb.astype(jnp.bfloat16), proj_ref[...],
                     preferred_element_type=jnp.float32) * norm_ref[...]

    col = jax.lax.broadcasted_iota(jnp.int32, (1, tile_c), 1)    # (1, TILE_C)
    if padded:
        # mask zero-padded class columns out of the softmax
        logits = jnp.where(col < (c_real - ci * tile_c), logits, -jnp.inf)

    hit = col == (labels - ci * tile_c)                          # (2B, TILE_C)
    tgt_sc[...] += jnp.sum(jnp.where(hit, logits, 0.0), axis=-1, keepdims=True)

    m_old = m_sc[...]
    m_new = jnp.maximum(m_old, jnp.max(logits, axis=-1, keepdims=True))
    s_sc[...] = (s_sc[...] * jnp.exp(m_old - m_new)
                 + jnp.sum(jnp.exp(logits - m_new), axis=-1, keepdims=True))
    m_sc[...] = m_new

    # ---------------- finalize on the last class tile -----------------------
    @pl.when(ci == nc - 1)
    def _():
        lse = m_sc[...] + jnp.log(s_sc[...])                     # (2B, 1)
        instance_loss = jnp.sum(lse - tgt_sc[...]) * inv_b       # mean_v + mean_t
        idx = jax.lax.broadcasted_iota(jnp.int32, (1, 3), 1)
        out_ref[...] = jnp.where(idx == 0, instance_loss, out_ref[...])


def _vmem_capacity_bytes():
    """Physical VMEM of the current generation (128 MiB v5e/v6e, 64 MiB v7x)."""
    try:
        cap = getattr(pltpu.get_tpu_info(), "vmem_capacity_bytes", None)
        if cap:
            return int(cap)
    except Exception:
        pass
    return 64 << 20  # conservative (v7x-sized) fallback


def _pick_tile_c(c, d, vmem_limit_bytes):
    """Largest multiple-of-128 class tile whose double-buffered bf16 (D, TILE_C)
    projection tile (+ f32 norm tile) stays within ~55% of the scoped limit."""
    budget = int(vmem_limit_bytes * 0.55)
    per_col = 2 * (2 * d + 4)           # 2 buffers x (bf16 column + f32 norm)
    tile = max(128, (budget // per_col) // 128 * 128)
    c128 = -(-c // 128) * 128
    return min(tile, c128)


def loss_computation(visual_embed, textual_embed, local_similarity, labels,
                     global_projection, tile_c=None):
    """Pallas-backed equivalent of LossComputation.forward."""
    b, d = visual_embed.shape
    c = global_projection.shape[1]

    # Stack vis/txt -> one (2B, D) matmul operand; tile labels to (2B, 1).
    emb = jnp.concatenate([visual_embed, textual_embed], axis=0)
    if emb.dtype != jnp.float32:
        emb = emb.astype(jnp.float32)
    sim = local_similarity
    if sim.dtype != jnp.float32:
        sim = sim.astype(jnp.float32)
    lbl = jnp.tile(labels.astype(jnp.int32).reshape(b, 1), (2, 1))

    # f32 column norms (accuracy), bf16 projection stream (bandwidth).
    proj_f32 = global_projection.astype(jnp.float32)
    inv_col_norm = jax.lax.rsqrt(
        jnp.sum(proj_f32 * proj_f32, axis=0, keepdims=True))       # (1, C)
    proj_bf16 = proj_f32.astype(jnp.bfloat16)                      # (D, C)

    # Generation-aware VMEM budget / class tile.
    vmem_cap = _vmem_capacity_bytes()
    vmem_limit = min(vmem_cap * 3 // 4, 96 * 1024 * 1024)          # 96 MiB v5e/v6e, 48 MiB v7x
    if tile_c is None:
        tile_c = _pick_tile_c(c, d, vmem_limit)
    assert tile_c % 128 == 0, "class tile must be a multiple of 128 lanes"

    # Pad C up to a multiple of the tile; padded columns are masked in-kernel.
    c_pad = -(-c // tile_c) * tile_c
    if c_pad != c:
        proj_bf16 = jnp.pad(proj_bf16, ((0, 0), (0, c_pad - c)))
        inv_col_norm = jnp.pad(inv_col_norm, ((0, 0), (0, c_pad - c)),
                               constant_values=1.0)
    grid = (c_pad // tile_c,)

    cost = pl.CostEstimate(
        flops=2 * (2 * b) * d * c_pad + 2 * b * b * d,
        transcendentals=(2 * b) * c_pad + 2 * b * b,
        bytes_accessed=2 * d * c_pad + 4 * (c_pad + 2 * b * d + b * b + 2 * b + 3),
    )

    kernel = functools.partial(_loss_kernel, c_real=c, padded=(c_pad != c))

    # TODO(synk): v7x dual-TensorCore split of C (CORE_PARALLEL / core_map with
    # per-core partial (m, s, tgt) outputs merged in a tiny epilogue).
    out = pl.pallas_call(
        kernel,
        out_shape=jax.ShapeDtypeStruct((1, 3), jnp.float32),
        grid_spec=pltpu.PrefetchScalarGridSpec(
            num_scalar_prefetch=0,
            grid=grid,
            in_specs=[
                pl.BlockSpec((2 * b, d), lambda ci: (0, 0)),       # stacked emb (f32, resident)
                pl.BlockSpec((d, tile_c), lambda ci: (0, ci)),     # proj tile (bf16, streamed)
                pl.BlockSpec((1, tile_c), lambda ci: (0, ci)),     # inv col norm (f32, streamed)
                pl.BlockSpec((b, b), lambda ci: (0, 0)),           # local sim (resident)
                pl.BlockSpec((2 * b, 1), lambda ci: (0, 0)),       # labels (resident)
            ],
            out_specs=pl.BlockSpec((1, 3), lambda ci: (0, 0)),
            scratch_shapes=[
                pltpu.VMEM((2 * b, 1), jnp.float32),   # running max
                pltpu.VMEM((2 * b, 1), jnp.float32),   # running sum
                pltpu.VMEM((2 * b, 1), jnp.float32),   # target logit accum
            ],
        ),
        compiler_params=pltpu.CompilerParams(
            dimension_semantics=("arbitrary",),
            vmem_limit_bytes=vmem_limit,
        ),
        cost_estimate=cost,
    )(emb, proj_bf16, inv_col_norm, sim, lbl)

    return {
        "instance_loss": out[0, 0],
        "global_align_loss": out[0, 1],
        "local_align_loss": out[0, 2],
    }


def _reference(visual_embed, textual_embed, local_similarity, labels, projection):
    """Pure-JAX f32 reference (mirrors the PyTorch losses)."""
    labels = labels.astype(jnp.int32)
    b = visual_embed.shape[0]
    pn = projection / jnp.linalg.norm(projection, axis=0, keepdims=True)
    vl, tl = visual_embed @ pn, textual_embed @ pn

    def ce(logits):
        logp = jax.nn.log_softmax(logits, axis=-1)
        return -jnp.mean(jnp.take_along_axis(logp, labels[:, None], axis=-1))

    inst = ce(vl) + ce(tl)

    vn = visual_embed / jnp.linalg.norm(visual_embed, axis=1, keepdims=True)
    tn = textual_embed / jnp.linalg.norm(textual_embed, axis=1, keepdims=True)
    gsim = vn @ tn.T
    pos = (labels[:, None] == labels[None, :]).astype(jnp.float32)

    def align(s):
        lp = jnp.log1p(jnp.exp(-SCALE_POS * (s - ALPHA)))
        ln = jnp.log1p(jnp.exp(SCALE_NEG * (s - BETA)))
        return (jnp.sum(pos * lp) + jnp.sum((1 - pos) * ln)) * 2.0 / b

    return {"instance_loss": inst, "global_align_loss": align(gsim),
            "local_align_loss": align(local_similarity)}


if __name__ == "__main__":
    B, FEATURE_SIZE = 8, 64

    key = jax.random.PRNGKey(0)
    k_v, k_t, k_s, k_l, k_p = jax.random.split(key, 5)

    visual_embed = jax.random.normal(k_v, (B, FEATURE_SIZE), jnp.float32)
    textual_embed = jax.random.normal(k_t, (B, FEATURE_SIZE), jnp.float32)
    local_similarity = jnp.tanh(jax.random.normal(k_s, (B, B), jnp.float32))

    def run_case(num_classes, tile_c):
        labels = jax.random.randint(k_l, (B,), 0, num_classes, jnp.int32)
        labels = labels.at[1].set(labels[0])  # ensure an off-diagonal positive pair
        bound = (6.0 / (FEATURE_SIZE + num_classes)) ** 0.5  # xavier-uniform
        proj = jax.random.uniform(k_p, (FEATURE_SIZE, num_classes),
                                  jnp.float32, -bound, bound)

        out = loss_computation(visual_embed, textual_embed, local_similarity,
                               labels, proj, tile_c=tile_c)
        jax.block_until_ready(out)
        ref = _reference(visual_embed, textual_embed, local_similarity,
                         labels, proj)

        # bf16 projection/embedding matmul -> slightly looser instance-loss tol
        assert jnp.allclose(out["instance_loss"], ref["instance_loss"],
                            rtol=2e-2, atol=2e-2), (
            "instance_loss", num_classes, out["instance_loss"], ref["instance_loss"])
        for name in ("global_align_loss", "local_align_loss"):
            assert jnp.allclose(out[name], ref[name], rtol=1e-3, atol=1e-3), (
                name, num_classes, out[name], ref[name])

    run_case(256, 128)    # 2-step class grid (exercises the online logsumexp)
    run_case(200, None)   # auto tile -> single padded tile (exercises -inf masking)

    print("KERNEL_OK")
</pallas_src>

<mosaic_0001>
module attributes {stable_mosaic.version = 11 : i64} {
  func.func @_loss_kernel(%arg0: i32, %arg1: memref<16x64xf32, #tpu.memory_space<vmem>>, %arg2: memref<64x128xbf16, #tpu.memory_space<vmem>>, %arg3: memref<1x128xf32, #tpu.memory_space<vmem>>, %arg4: memref<8x8xf32, #tpu.memory_space<vmem>>, %arg5: memref<16x1xi32, #tpu.memory_space<vmem>>, %arg6: memref<1x3xf32, #tpu.memory_space<vmem>>, %arg7: memref<16x1xf32, #tpu.memory_space<vmem>>, %arg8: memref<16x1xf32, #tpu.memory_space<vmem>>, %arg9: memref<16x1xf32, #tpu.memory_space<vmem>>) attributes {dimension_semantics = [#tpu.dimension_semantics<arbitrary>], iteration_bounds = array<i64: 2>, scalar_prefetch = 0 : i64, scratch_operands = 3 : i64, tpu.core_type = #tpu.core_type<tc>, window_params = [{pipeline_mode = #tpu.pipeline_mode<synchronous>, transform_indices = @transform_0, window_bounds = array<i64: 16, 64>}, {transform_indices = @transform_1, window_bounds = array<i64: 64, 128>}, {transform_indices = @transform_2, window_bounds = array<i64: 1, 128>}, {pipeline_mode = #tpu.pipeline_mode<synchronous>, transform_indices = @transform_3, window_bounds = array<i64: 8, 8>}, {pipeline_mode = #tpu.pipeline_mode<synchronous>, transform_indices = @transform_4, window_bounds = array<i64: 16, 1>}, {pipeline_mode = #tpu.pipeline_mode<synchronous>, transform_indices = @transform_5, window_bounds = array<i64: 1, 3>}]} {
    %c0 = arith.constant 0 : index
    %c0_0 = arith.constant 0 : index
    %0 = vector.load %arg1[%c0, %c0_0] : memref<16x64xf32, #tpu.memory_space<vmem>>, vector<16x64xf32>
    %c0_1 = arith.constant 0 : index
    %c0_2 = arith.constant 0 : index
    %1 = vector.load %arg5[%c0_1, %c0_2] : memref<16x1xi32, #tpu.memory_space<vmem>>, vector<16x1xi32>
    %c0_i32 = arith.constant 0 : i32
    %2 = arith.cmpi eq, %arg0, %c0_i32 : i32
    %3 = arith.extui %2 : i1 to i32
    %c0_i32_3 = arith.constant 0 : i32
    %4 = arith.cmpi ne, %3, %c0_i32_3 : i32
    scf.if %4 {
      %cst_25 = arith.constant 0xFF800000 : f32
      %44 = vector.broadcast %cst_25 : f32 to vector<16x1xf32>
      %c0_26 = arith.constant 0 : index
      %c0_27 = arith.constant 0 : index
      %45 = vector.load %arg7[%c0_26, %c0_27] : memref<16x1xf32, #tpu.memory_space<vmem>>, vector<16x1xf32>
      tpu.vector_store %arg7[%c0_26, %c0_27], %44 {strides = array<i32>} : memref<16x1xf32, #tpu.memory_space<vmem>>, vector<16x1xf32>,
      %cst_28 = arith.constant 0.000000e+00 : f32
      %46 = vector.broadcast %cst_28 : f32 to vector<16x1xf32>
      %c0_29 = arith.constant 0 : index
      %c0_30 = arith.constant 0 : index
      %47 = vector.load %arg8[%c0_29, %c0_30] : memref<16x1xf32, #tpu.memory_space<vmem>>, vector<16x1xf32>
      tpu.vector_store %arg8[%c0_29, %c0_30], %46 {strides = array<i32>} : memref<16x1xf32, #tpu.memory_space<vmem>>, vector<16x1xf32>,
      %cst_31 = arith.constant 0.000000e+00 : f32
      %48 = vector.broadcast %cst_31 : f32 to vector<16x1xf32>
      %c0_32 = arith.constant 0 : index
      %c0_33 = arith.constant 0 : index
      %49 = vector.load %arg9[%c0_32, %c0_33] : memref<16x1xf32, #tpu.memory_space<vmem>>, vector<16x1xf32>
      tpu.vector_store %arg9[%c0_32, %c0_33], %48 {strides = array<i32>} : memref<16x1xf32, #tpu.memory_space<vmem>>, vector<16x1xf32>,
      %50 = arith.mulf %0, %0 : vector<16x64xf32>
      %cst_34 = arith.constant dense<0.000000e+00> : vector<16xf32>
      %51 = vector.multi_reduction <add>, %50, %cst_34 [1] : vector<16x64xf32> to vector<16xf32>
      %52 = vector.shape_cast %51 : vector<16xf32> to vector<16x1xf32>
      %53 = math.rsqrt %52 : vector<16x1xf32>
      %54 = vector.broadcast %53 : vector<16x1xf32> to vector<16x64xf32>
      %55 = arith.mulf %0, %54 : vector<16x64xf32>
      %56 = vector.extract_strided_slice %55 {offsets = [0, 0], sizes = [8, 64], strides = [1, 1]} : vector<16x64xf32> to vector<8x64xf32>
      %57 = vector.extract_strided_slice %55 {offsets = [8, 0], sizes = [8, 64], strides = [1, 1]} : vector<16x64xf32> to vector<8x64xf32>
      %cst_35 = arith.constant dense<0.000000e+00> : vector<8x8xf32>
      %58 = tpu.matmul %56, %57, %cst_35 {dimension_numbers = #tpu.dot_dimension_numbers<[1], [1], [0], [0], [0, 0, 1, 0], [], []>} : vector<8x64xf32>, vector<8x64xf32>, vector<8x8xf32> -> vector<8x8xf32>
      %59 = vector.extract_strided_slice %1 {offsets = [0, 0], sizes = [8, 1], strides = [1, 1]} : vector<16x1xi32> to vector<8x1xi32>
      %60 = tpu.transpose %59, [1, 0] : vector<8x1xi32> -> vector<1x8xi32>
      %61 = vector.broadcast %59 : vector<8x1xi32> to vector<8x8xi32>
      %62 = vector.broadcast %60 : vector<1x8xi32> to vector<8x8xi32>
      %63 = arith.cmpi eq, %61, %62 : vector<8x8xi32>
      %cst_36 = arith.constant 6.000000e-01 : f32
      %64 = vector.broadcast %cst_36 : f32 to vector<8x8xf32>
      %65 = arith.subf %58, %64 : vector<8x8xf32>
      %cst_37 = arith.constant -1.000000e+01 : f32
      %66 = vector.broadcast %cst_37 : f32 to vector<8x8xf32>
      %67 = arith.mulf %66, %65 : vector<8x8xf32>
      %cst_38 = arith.constant 4.000000e-01 : f32
      %68 = vector.broadcast %cst_38 : f32 to vector<8x8xf32>
      %69 = arith.subf %58, %68 : vector<8x8xf32>
      %cst_39 = arith.constant 4.000000e+01 : f32
      %70 = vector.broadcast %cst_39 : f32 to vector<8x8xf32>
      %71 = arith.mulf %70, %69 : vector<8x8xf32>
      %72 = arith.select %63, %67, %71 : vector<8x8xi1>, vector<8x8xf32>
      %cst_40 = arith.constant 0.000000e+00 : f32
      %73 = vector.broadcast %cst_40 : f32 to vector<8x8xf32>
      %74 = arith.maximumf %72, %73 : vector<8x8xf32>
      %75 = math.absf %72 : vector<8x8xf32>
      %cst_41 = arith.constant 0.000000e+00 : f32
      %76 = vector.broadcast %cst_41 : f32 to vector<8x8xf32>
      %77 = arith.subf %76, %75 : vector<8x8xf32>
      %78 = math.exp %77 : vector<8x8xf32>
      %79 = math.log1p %78 : vector<8x8xf32>
      %80 = arith.addf %74, %79 : vector<8x8xf32>
      %81 = vector.shape_cast %80 : vector<8x8xf32> to vector<1x8x8xf32>
      %cst_42 = arith.constant dense<0.000000e+00> : vector<1xf32>
      %82 = vector.multi_reduction <add>, %81, %cst_42 [1, 2] : vector<1x8x8xf32> to vector<1xf32>
      %83 = vector.shape_cast %82 : vector<1xf32> to vector<1x1x1xf32>
      %84 = vector.extract %83[0, 0, 0] : f32 from vector<1x1x1xf32>
      %cst_43 = arith.constant 2.000000e+00 : f32
      %85 = arith.mulf %84, %cst_43 : f32
      %cst_44 = arith.constant 1.250000e-01 : f32
      %86 = arith.mulf %85, %cst_44 : f32
      %c0_45 = arith.constant 0 : index
      %c0_46 = arith.constant 0 : index
      %87 = vector.load %arg4[%c0_45, %c0_46] : memref<8x8xf32, #tpu.memory_space<vmem>>, vector<8x8xf32>
      %cst_47 = arith.constant 6.000000e-01 : f32
      %88 = vector.broadcast %cst_47 : f32 to vector<8x8xf32>
      %89 = arith.subf %87, %88 : vector<8x8xf32>
      %cst_48 = arith.constant -1.000000e+01 : f32
      %90 = vector.broadcast %cst_48 : f32 to vector<8x8xf32>
      %91 = arith.mulf %90, %89 : vector<8x8xf32>
      %cst_49 = arith.constant 4.000000e-01 : f32
      %92 = vector.broadcast %cst_49 : f32 to vector<8x8xf32>
      %93 = arith.subf %87, %92 : vector<8x8xf32>
      %cst_50 = arith.constant 4.000000e+01 : f32
      %94 = vector.broadcast %cst_50 : f32 to vector<8x8xf32>
      %95 = arith.mulf %94, %93 : vector<8x8xf32>
      %96 = arith.select %63, %91, %95 : vector<8x8xi1>, vector<8x8xf32>
      %cst_51 = arith.constant 0.000000e+00 : f32
      %97 = vector.broadcast %cst_51 : f32 to vector<8x8xf32>
      %98 = arith.maximumf %96, %97 : vector<8x8xf32>
      %99 = math.absf %96 : vector<8x8xf32>
      %cst_52 = arith.constant 0.000000e+00 : f32
      %100 = vector.broadcast %cst_52 : f32 to vector<8x8xf32>
      %101 = arith.subf %100, %99 : vector<8x8xf32>
      %102 = math.exp %101 : vector<8x8xf32>
      %103 = math.log1p %102 : vector<8x8xf32>
      %104 = arith.addf %98, %103 : vector<8x8xf32>
      %105 = vector.shape_cast %104 : vector<8x8xf32> to vector<1x8x8xf32>
      %cst_53 = arith.constant dense<0.000000e+00> : vector<1xf32>
      %106 = vector.multi_reduction <add>, %105, %cst_53 [1, 2] : vector<1x8x8xf32> to vector<1xf32>
      %107 = vector.shape_cast %106 : vector<1xf32> to vector<1x1x1xf32>
      %108 = vector.extract %107[0, 0, 0] : f32 from vector<1x1x1xf32>
      %cst_54 = arith.constant 2.000000e+00 : f32
      %109 = arith.mulf %108, %cst_54 : f32
      %cst_55 = arith.constant 1.250000e-01 : f32
      %110 = arith.mulf %109, %cst_55 : f32
      %111 = tpu.iota {dimensions = array<i32: 1>} : vector<1x3xi32>
      %c1_i32_56 = arith.constant 1 : i32
      %112 = vector.broadcast %c1_i32_56 : i32 to vector<1x3xi32>
      %113 = arith.cmpi eq, %111, %112 : vector<1x3xi32>
      %c2_i32 = arith.constant 2 : i32
      %114 = vector.broadcast %c2_i32 : i32 to vector<1x3xi32>
      %115 = arith.cmpi eq, %111, %114 : vector<1x3xi32>
      %cst_57 = arith.constant 0.000000e+00 : f32
      %116 = vector.broadcast %110 : f32 to vector<1x3xf32>
      %117 = vector.broadcast %cst_57 : f32 to vector<1x3xf32>
      %118 = arith.select %115, %116, %117 : vector<1x3xi1>, vector<1x3xf32>
      %119 = vector.broadcast %86 : f32 to vector<1x3xf32>
      %120 = arith.select %113, %119, %118 : vector<1x3xi1>, vector<1x3xf32>
      %c0_58 = arith.constant 0 : index
      %c0_59 = arith.constant 0 : index
      %121 = vector.load %arg6[%c0_58, %c0_59] : memref<1x3xf32, #tpu.memory_space<vmem>>, vector<1x3xf32>
      tpu.vector_store %arg6[%c0_58, %c0_59], %120 {strides = array<i32>} : memref<1x3xf32, #tpu.memory_space<vmem>>, vector<1x3xf32>,
    } else {
    }
    %5 = arith.truncf %0 : vector<16x64xf32> to vector<16x64xbf16>
    %c0_4 = arith.constant 0 : index
    %c0_5 = arith.constant 0 : index
    %6 = vector.load %arg2[%c0_4, %c0_5] : memref<64x128xbf16, #tpu.memory_space<vmem>>, vector<64x128xbf16>
    %cst = arith.constant dense<0.000000e+00> : vector<16x128xf32>
    %7 = tpu.matmul %5, %6, %cst {dimension_numbers = #tpu.dot_dimension_numbers<[1], [0], [0], [1], [0, 0, 1, 1], [], []>} : vector<16x64xbf16>, vector<64x128xbf16>, vector<16x128xf32> -> vector<16x128xf32>
    %c0_6 = arith.constant 0 : index
    %c0_7 = arith.constant 0 : index
    %8 = vector.load %arg3[%c0_6, %c0_7] : memref<1x128xf32, #tpu.memory_space<vmem>>, vector<1x128xf32>
    %9 = vector.broadcast %8 : vector<1x128xf32> to vector<16x128xf32>
    %10 = arith.mulf %7, %9 : vector<16x128xf32>
    %11 = tpu.iota {dimensions = array<i32: 1>} : vector<1x128xi32>
    %c128_i32 = arith.constant 128 : i32
    %12 = arith.muli %arg0, %c128_i32 : i32
    %13 = vector.broadcast %12 : i32 to vector<16x1xi32>
    %14 = arith.subi %1, %13 : vector<16x1xi32>
    %15 = vector.broadcast %11 : vector<1x128xi32> to vector<16x128xi32>
    %16 = vector.broadcast %14 : vector<16x1xi32> to vector<16x128xi32>
    %17 = arith.cmpi eq, %15, %16 : vector<16x128xi32>
    %c0_8 = arith.constant 0 : index
    %c0_9 = arith.constant 0 : index
    %18 = vector.load %arg9[%c0_8, %c0_9] : memref<16x1xf32, #tpu.memory_space<vmem>>, vector<16x1xf32>
    %cst_10 = arith.constant 0.000000e+00 : f32
    %19 = vector.broadcast %cst_10 : f32 to vector<16x128xf32>
    %20 = arith.select %17, %10, %19 : vector<16x128xi1>, vector<16x128xf32>
    %cst_11 = arith.constant dense<0.000000e+00> : vector<16xf32>
    %21 = vector.multi_reduction <add>, %20, %cst_11 [1] : vector<16x128xf32> to vector<16xf32>
    %22 = vector.shape_cast %21 : vector<16xf32> to vector<16x1xf32>
    %23 = arith.addf %18, %22 : vector<16x1xf32>
    %c0_12 = arith.constant 0 : index
    %c0_13 = arith.constant 0 : index
    %24 = vector.load %arg9[%c0_12, %c0_13] : memref<16x1xf32, #tpu.memory_space<vmem>>, vector<16x1xf32>
    tpu.vector_store %arg9[%c0_12, %c0_13], %23 {strides = array<i32>} : memref<16x1xf32, #tpu.memory_space<vmem>>, vector<16x1xf32>,
    %c0_14 = arith.constant 0 : index
    %c0_15 = arith.constant 0 : index
    %25 = vector.load %arg7[%c0_14, %c0_15] : memref<16x1xf32, #tpu.memory_space<vmem>>, vector<16x1xf32>
    %cst_16 = arith.constant dense<0xFF800000> : vector<16xf32>
    %26 = vector.multi_reduction <maximumf>, %10, %cst_16 [1] : vector<16x128xf32> to vector<16xf32>
    %27 = vector.shape_cast %26 : vector<16xf32> to vector<16x1xf32>
    %28 = arith.maximumf %25, %27 : vector<16x1xf32>
    %c0_17 = arith.constant 0 : index
    %c0_18 = arith.constant 0 : index
    %29 = vector.load %arg8[%c0_17, %c0_18] : memref<16x1xf32, #tpu.memory_space<vmem>>, vector<16x1xf32>
    %30 = arith.subf %25, %28 : vector<16x1xf32>
    %31 = math.exp %30 : vector<16x1xf32>
    %32 = arith.mulf %29, %31 : vector<16x1xf32>
    %33 = vector.broadcast %28 : vector<16x1xf32> to vector<16x128xf32>
    %34 = arith.subf %10, %33 : vector<16x128xf32>
    %35 = math.exp %34 : vector<16x128xf32>
    %cst_19 = arith.constant dense<0.000000e+00> : vector<16xf32>
    %36 = vector.multi_reduction <add>, %35, %cst_19 [1] : vector<16x128xf32> to vector<16xf32>
    %37 = vector.shape_cast %36 : vector<16xf32> to vector<16x1xf32>
    %38 = arith.addf %32, %37 : vector<16x1xf32>
    %c0_20 = arith.constant 0 : index
    %c0_21 = arith.constant 0 : index
    %39 = vector.load %arg8[%c0_20, %c0_21] : memref<16x1xf32, #tpu.memory_space<vmem>>, vector<16x1xf32>
    tpu.vector_store %arg8[%c0_20, %c0_21], %38 {strides = array<i32>} : memref<16x1xf32, #tpu.memory_space<vmem>>, vector<16x1xf32>,
    %c0_22 = arith.constant 0 : index
    %c0_23 = arith.constant 0 : index
    %40 = vector.load %arg7[%c0_22, %c0_23] : memref<16x1xf32, #tpu.memory_space<vmem>>, vector<16x1xf32>
    tpu.vector_store %arg7[%c0_22, %c0_23], %28 {strides = array<i32>} : memref<16x1xf32, #tpu.memory_space<vmem>>, vector<16x1xf32>,
    %c1_i32 = arith.constant 1 : i32
    %41 = arith.cmpi eq, %arg0, %c1_i32 : i32
    %42 = arith.extui %41 : i1 to i32
    %c0_i32_24 = arith.constant 0 : i32
    %43 = arith.cmpi ne, %42, %c0_i32_24 : i32
    scf.if %43 {
      %c0_25 = arith.constant 0 : index
      %c0_26 = arith.constant 0 : index
      %44 = vector.load %arg7[%c0_25, %c0_26] : memref<16x1xf32, #tpu.memory_space<vmem>>, vector<16x1xf32>
      %c0_27 = arith.constant 0 : index
      %c0_28 = arith.constant 0 : index
      %45 = vector.load %arg8[%c0_27, %c0_28] : memref<16x1xf32, #tpu.memory_space<vmem>>, vector<16x1xf32>
      %46 = math.log %45 : vector<16x1xf32>
      %47 = arith.addf %44, %46 : vector<16x1xf32>
      %c0_29 = arith.constant 0 : index
      %c0_30 = arith.constant 0 : index
      %48 = vector.load %arg9[%c0_29, %c0_30] : memref<16x1xf32, #tpu.memory_space<vmem>>, vector<16x1xf32>
      %49 = arith.subf %47, %48 : vector<16x1xf32>
      %50 = vector.shape_cast %49 : vector<16x1xf32> to vector<1x16x1xf32>
      %cst_31 = arith.constant dense<0.000000e+00> : vector<1xf32>
      %51 = vector.multi_reduction <add>, %50, %cst_31 [1, 2] : vector<1x16x1xf32> to vector<1xf32>
      %52 = vector.shape_cast %51 : vector<1xf32> to vector<1x1x1xf32>
      %53 = vector.extract %52[0, 0, 0] : f32 from vector<1x1x1xf32>
      %cst_32 = arith.constant 1.250000e-01 : f32
      %54 = arith.mulf %53, %cst_32 : f32
      %55 = tpu.iota {dimensions = array<i32: 1>} : vector<1x3xi32>
      %c0_i32_33 = arith.constant 0 : i32
      %56 = vector.broadcast %c0_i32_33 : i32 to vector<1x3xi32>
      %57 = arith.cmpi eq, %55, %56 : vector<1x3xi32>
      %c0_34 = arith.constant 0 : index
      %c0_35 = arith.constant 0 : index
      %58 = vector.load %arg6[%c0_34, %c0_35] : memref<1x3xf32, #tpu.memory_space<vmem>>, vector<1x3xf32>
      %59 = vector.broadcast %54 : f32 to vector<1x3xf32>
      %60 = arith.select %57, %59, %58 : vector<1x3xi1>, vector<1x3xf32>
      %c0_36 = arith.constant 0 : index
      %c0_37 = arith.constant 0 : index
      %61 = vector.load %arg6[%c0_36, %c0_37] : memref<1x3xf32, #tpu.memory_space<vmem>>, vector<1x3xf32>
      tpu.vector_store %arg6[%c0_36, %c0_37], %60 {strides = array<i32>} : memref<1x3xf32, #tpu.memory_space<vmem>>, vector<1x3xf32>,
    } else {
    }
    return
  }
  func.func @transform_0(%arg0: i32) -> (i32, i32) {
    %c0_i32 = arith.constant 0 : i32
    %c0_i32_0 = arith.constant 0 : i32
    %c0_i32_1 = arith.constant 0 : i32
    return %c0_i32, %c0_i32_0 : i32, i32
  }
  func.func @transform_1(%arg0: i32) -> (i32, i32) {
    %c0_i32 = arith.constant 0 : i32
    %c0_i32_0 = arith.constant 0 : i32
    return %c0_i32, %arg0 : i32, i32
  }
  func.func @transform_2(%arg0: i32) -> (i32, i32) {
    %c0_i32 = arith.constant 0 : i32
    %c0_i32_0 = arith.constant 0 : i32
    return %c0_i32, %arg0 : i32, i32
  }
  func.func @transform_3(%arg0: i32) -> (i32, i32) {
    %c0_i32 = arith.constant 0 : i32
    %c0_i32_0 = arith.constant 0 : i32
    %c0_i32_1 = arith.constant 0 : i32
    return %c0_i32, %c0_i32_0 : i32, i32
  }
  func.func @transform_4(%arg0: i32) -> (i32, i32) {
    %c0_i32 = arith.constant 0 : i32
    %c0_i32_0 = arith.constant 0 : i32
    %c0_i32_1 = arith.constant 0 : i32
    return %c0_i32, %c0_i32_0 : i32, i32
  }
  func.func @transform_5(%arg0: i32) -> (i32, i32) {
    %c0_i32 = arith.constant 0 : i32
    %c0_i32_0 = arith.constant 0 : i32
    %c0_i32_1 = arith.constant 0 : i32
    return %c0_i32, %c0_i32_0 : i32, i32
  }
}

</mosaic_0001>

<llo_original>
// kernel: tpu_custom_call.1
$region0: #{tpu_custom_call.1}
  #allocation0 [shape = 'u32[]', space=smem, size = 0x4, offset = 0x4, fixed_abs, tag = 'smem constant byte address 0x4 - core index']
  #allocation1 [shape = 'u32[144,128]{1,0:T(1,128)}', space=vmem, size = 0x12000, scoped, tag = 'internal scratch']
  #allocation2 [shape = 'f32[16,1]{1,0:T(8,128)}', space=vmem, size = 0x2000, scoped, tag = 'scratch operand']
  #allocation3 [shape = 'f32[16,1]{1,0:T(8,128)}', space=vmem, size = 0x2000, scoped, tag = 'scratch operand']
  #allocation4 [shape = 'f32[16,1]{1,0:T(8,128)}', space=vmem, size = 0x2000, scoped, tag = 'scratch operand']
  %s0 = inlined_call_operand.vmem [shape: f32[16,64], index: 0, kind: input, shape index: {}]
  %s1 = inlined_call_operand.hbm [shape: bf16[64,256], index: 1, kind: input, shape index: {}]
  %s2 = inlined_call_operand.hbm [shape: f32[1,256], index: 2, kind: input, shape index: {}]
  %s3 = inlined_call_operand.vmem [shape: f32[8,8], index: 3, kind: input, shape index: {}]
  %s4 = inlined_call_operand.vmem [shape: s32[16,1], index: 4, kind: input, shape index: {}]
  %s5 = inlined_call_operand.hbm [shape: f32[1,3], index: 5, kind: output, shape index: {}]
  %s6 = sld [smem:[#allocation0]]
  $region69: #{tpu_custom_call.1} parent=0
    _
  %s8 = ssub.s32 1, %s6
  %s9 = scalar_select 0, %s8, %s6
  $region1: #{tpu_custom_call.1} parent=0
    #allocation5 [shape = 'u8[32768]{0}', space=vmem, size = 0x8000, scoped, tag = 'input window, operand 1']
    #allocation6 [shape = 's32[2]{0}', space=sflag, size = 0x8, scoped, tag = 'scoped memory for tpu_custom_call.1']
    #allocation7 [shape = 's32[2]{0}', space=sflag, size = 0x8, scoped, tag = 'scoped memory for tpu_custom_call.1']
    #allocation8 [shape = 'u8[1024]{0}', space=vmem, size = 0x400, scoped, tag = 'input window, operand 2']
    #allocation9 [shape = 's32[2]{0}', space=sflag, size = 0x8, scoped, tag = 'scoped memory for tpu_custom_call.1']
    #allocation10 [shape = 'u8[512]{0}', space=vmem, size = 0x400, scoped, tag = 'output window, operand 0, single buffered']
    %10 = vsyncpa [#allocation6], 0
    %s11 = scalar_lea.sflag [#allocation6], 1
    %12 = vsyncpa %s11, 0
    %13 = vsyncpa [#allocation9], 0
    %s14 = scalar_lea.sflag [#allocation9], 1
    %15 = vsyncpa %s14, 0
    %16 = vsyncpa [#allocation7], 0
    loop: start=0, step=1, limit=4
    $region2: #{tpu_custom_call.1} parent=1 // loop_pre_header
      _
    $region3: #{tpu_custom_call.1} parent=1 // loop_header
      %s18 = sphi 0, %s22
      %p19 = scmp.ge.s32.totalorder %s18, 4
      %s26 = sphi 0, %s26
      %s28 = sphi 0, %s26
      %s29 = sphi 0, %s28
      %s43 = sphi 0, %s29
      %s49 = sphi 0, %s51
      %s52 = sphi 0, %s49
      %s53 = sphi 0, %s52
      %s69 = sphi 0, %s53
      %s75 = sphi 0, %s77
      %s78 = sphi 0, %s75
      %s79 = sphi 0, %s78
      %s95 = sphi 0, %s79
      %s99 = sphi 0, %s99
      %s101 = sphi 0, %s99
      %s102 = sphi 0, %s101
      %s116 = sphi 0, %s102
      %s120 = sphi 0, %s120
      %s122 = sphi 0, %s120
      %s123 = sphi 0, %s122
      %s137 = sphi 0, %s123
      %s141 = sphi 0, %s141
      %s143 = sphi 0, %s141
      %s144 = sphi 0, %s143
      %s158 = sphi 0, %s144
    $region4: #{tpu_custom_call.1} parent=1 // loop_header_branch
      %21 = sbr.rel (%p19) target = $region8
    $region5: #{tpu_custom_call.1} parent=1 // loop_body
      %s23 = ssub.s32 %s18, 1
      %s24 = ssub.s32 %s18, 2
      %s25 = sadd.s32 %s18, 1
      %s27 = sadd.s32 %s26, 1
      %p30 = scmp.eq.s32.totalorder %s18, 1
      %p31 = scmp.ne.s32.totalorder %s26, %s28
      %p32 = scmp.eq.s32.totalorder %s18, 0
      %p33 = por %p31, %p32
      %p34 = scmp.ne.s32.totalorder %s26, %s28
      %p35 = scmp.eq.s32.totalorder %s23, 1
      %p36 = por %p34, %p35
      %p37 = scmp.ne.s32.totalorder %s28, %s29
      %p38 = scmp.eq.s32.totalorder %s23, 0
      %p39 = por %p37, %p38
      %p40 = scmp.ne.s32.totalorder %s28, %s29
      %p41 = scmp.eq.s32.totalorder %s24, 1
      %p42 = por %p40, %p41
      %p44 = scmp.ne.s32.totalorder %s29, %s43
      %p45 = scmp.eq.s32.totalorder %s24, 0
      %p46 = por %p44, %p45
      %s47 = ssub.s32 %s18, %s25
      %p48 = scmp.eq.s32.totalorder %s47, 0
      %s50 = sadd.s32 %s49, 1
      %s51 = scalar_select %p48, %s49, %s50
      %p54 = pneg %p48
      %p55 = scmp.eq.s32.totalorder %s18, 1
      %p56 = por %p54, %p55
      %p57 = scmp.ne.s32.totalorder %s49, %s52
      %p58 = scmp.eq.s32.totalorder %s18, 0
      %p59 = por %p57, %p58
      %p60 = scmp.ne.s32.totalorder %s49, %s52
      %p61 = scmp.eq.s32.totalorder %s23, 1
      %p62 = por %p60, %p61
      %p63 = scmp.ne.s32.totalorder %s52, %s53
      %p64 = scmp.eq.s32.totalorder %s23, 0
      %p65 = por %p63, %p64
      %p66 = scmp.ne.s32.totalorder %s52, %s53
      %p67 = scmp.eq.s32.totalorder %s24, 1
      %p68 = por %p66, %p67
      %p70 = scmp.ne.s32.totalorder %s53, %s69
      %p71 = scmp.eq.s32.totalorder %s24, 0
      %p72 = por %p70, %p71
      %s73 = ssub.s32 %s18, %s25
      %p74 = scmp.eq.s32.totalorder %s73, 0
      %s76 = sadd.s32 %s75, 1
      %s77 = scalar_select %p74, %s75, %s76
      %p80 = pneg %p74
      %p81 = scmp.eq.s32.totalorder %s18, 1
      %p82 = por %p80, %p81
      %p83 = scmp.ne.s32.totalorder %s75, %s78
      %p84 = scmp.eq.s32.totalorder %s18, 0
      %p85 = por %p83, %p84
      %p86 = scmp.ne.s32.totalorder %s75, %s78
      %p87 = scmp.eq.s32.totalorder %s23, 1
      %p88 = por %p86, %p87
      %p89 = scmp.ne.s32.totalorder %s78, %s79
      %p90 = scmp.eq.s32.totalorder %s23, 0
      %p91 = por %p89, %p90
      %p92 = scmp.ne.s32.totalorder %s78, %s79
      %p93 = scmp.eq.s32.totalorder %s24, 1
      %p94 = por %p92, %p93
      %p96 = scmp.ne.s32.totalorder %s79, %s95
      %p97 = scmp.eq.s32.totalorder %s24, 0
      %p98 = por %p96, %p97
      %s100 = sadd.s32 %s99, 1
      %p103 = scmp.eq.s32.totalorder %s18, 1
      %p104 = scmp.ne.s32.totalorder %s99, %s101
      %p105 = scmp.eq.s32.totalorder %s18, 0
      %p106 = por %p104, %p105
      %p107 = scmp.ne.s32.totalorder %s99, %s101
      %p108 = scmp.eq.s32.totalorder %s23, 1
      %p109 = por %p107, %p108
      %p110 = scmp.ne.s32.totalorder %s101, %s102
      %p111 = scmp.eq.s32.totalorder %s23, 0
      %p112 = por %p110, %p111
      %p113 = scmp.ne.s32.totalorder %s101, %s102
      %p114 = scmp.eq.s32.totalorder %s24, 1
      %p115 = por %p113, %p114
      %p117 = scmp.ne.s32.totalorder %s102, %s116
      %p118 = scmp.eq.s32.totalorder %s24, 0
      %p119 = por %p117, %p118
      %s121 = sadd.s32 %s120, 1
      %p124 = scmp.eq.s32.totalorder %s18, 1
      %p125 = scmp.ne.s32.totalorder %s120, %s122
      %p126 = scmp.eq.s32.totalorder %s18, 0
      %p127 = por %p125, %p126
      %p128 = scmp.ne.s32.totalorder %s120, %s122
      %p129 = scmp.eq.s32.totalorder %s23, 1
      %p130 = por %p128, %p129
      %p131 = scmp.ne.s32.totalorder %s122, %s123
      %p132 = scmp.eq.s32.totalorder %s23, 0
      %p133 = por %p131, %p132
      %p134 = scmp.ne.s32.totalorder %s122, %s123
      %p135 = scmp.eq.s32.totalorder %s24, 1
      %p136 = por %p134, %p135
      %p138 = scmp.ne.s32.totalorder %s123, %s137
      %p139 = scmp.eq.s32.totalorder %s24, 0
      %p140 = por %p138, %p139
      %s142 = sadd.s32 %s141, 1
      %p145 = scmp.eq.s32.totalorder %s18, 1
      %p146 = scmp.ne.s32.totalorder %s141, %s143
      %p147 = scmp.eq.s32.totalorder %s18, 0
      %p148 = por %p146, %p147
      %p149 = scmp.ne.s32.totalorder %s141, %s143
      %p150 = scmp.eq.s32.totalorder %s23, 1
      %p151 = por %p149, %p150
      %p152 = scmp.ne.s32.totalorder %s143, %s144
      %p153 = scmp.eq.s32.totalorder %s23, 0
      %p154 = por %p152, %p153
      %p155 = scmp.ne.s32.totalorder %s143, %s144
      %p156 = scmp.eq.s32.totalorder %s24, 1
      %p157 = por %p155, %p156
      %p159 = scmp.ne.s32.totalorder %s144, %s158
      %p160 = scmp.eq.s32.totalorder %s24, 0
      %p161 = por %p159, %p160
      %p162 = scmp.le.s32.totalorder 1, %s18
      %p163 = scmp.lt.s32.totalorder %s18, 3
      %p164 = pnand %p162, %p163
      %p165 = pneg %p164
      // Predicated region
      $region9: #{tpu_custom_call.1} parent=5 // pred_check
        _
      $region10: #{tpu_custom_call.1} parent=5 // pred_check_branch
        %167 = sbr.rel (%p164) target = $region12
      $region11: #{tpu_custom_call.1} parent=5 // pred_region
        %s168 = ssub.s32 %s18, 1
        // Predicated region
        $region13: #{tpu_custom_call.1} parent=11 // pred_check
          %p169 = pneg %p39
        $region14: #{tpu_custom_call.1} parent=11 // pred_check_branch
          %171 = sbr.rel (%p169) target = $region16
        $region15: #{tpu_custom_call.1} parent=11 // pred_region
          _
        $region16: #{tpu_custom_call.1} parent=11 // pred_fallthru
          _
        // Predicated region
        $region17: #{tpu_custom_call.1} parent=11 // pred_check
          %p172 = pneg %p112
        $region18: #{tpu_custom_call.1} parent=11 // pred_check_branch
          %174 = sbr.rel (%p172) target = $region20
        $region19: #{tpu_custom_call.1} parent=11 // pred_region
          _
        $region20: #{tpu_custom_call.1} parent=11 // pred_fallthru
          _
        // Predicated region
        $region21: #{tpu_custom_call.1} parent=11 // pred_check
          %p175 = pneg %p133
        $region22: #{tpu_custom_call.1} parent=11 // pred_check_branch
          %177 = sbr.rel (%p175) target = $region24
        $region23: #{tpu_custom_call.1} parent=11 // pred_region
          _
        $region24: #{tpu_custom_call.1} parent=11 // pred_fallthru
          _
      $region12: #{tpu_custom_call.1} parent=5 // pred_fallthru
        _
      %p178 = scmp.lt.s32.totalorder %s18, 2
      // Predicated region
      $region25: #{tpu_custom_call.1} parent=5 // pred_check
        %p179 = pneg %p178
      $region26: #{tpu_custom_call.1} parent=5 // pred_check_branch
        %181 = sbr.rel (%p179) target = $region28
      $region27: #{tpu_custom_call.1} parent=5 // pred_region
        // Predicated region
        $region29: #{tpu_custom_call.1} parent=27 // pred_check
          %p182 = pneg %p59
        $region30: #{tpu_custom_call.1} parent=27 // pred_check_branch
          %184 = sbr.rel (%p182) target = $region32
        $region31: #{tpu_custom_call.1} parent=27 // pred_region
          %s185 = sand.u32 %s49, 1
          %s186 = scalar_lea.sflag [#allocation6], %s185
          %s187 = sand.u32 %s49, 1
          %s188 = smul.addr %s187, 32
          %s189 = scalar_lea.vmem [#allocation5], %s188
          %s191 = ssub.s32 512, 512
          %192 = vsyncadd %s186, %s191
          %s193 = smul.addr %s18, 64
          %s194 = scalar_lea.hbm %s1, %s193
          %s195 = sshll.u32 %s189, 4
          %s196 = int_to_ptr.vmem [resolvable:$true] %s195
          %201 = dma.hbm_to_vmem [thread:$0]  %s194, 512, %s196, %s186, 128, 64, 4
        $region32: #{tpu_custom_call.1} parent=27 // pred_fallthru
          _
        // Predicated region
        $region33: #{tpu_custom_call.1} parent=27 // pred_check
          %p202 = pneg %p85
        $region34: #{tpu_custom_call.1} parent=27 // pred_check_branch
          %204 = sbr.rel (%p202) target = $region36
        $region35: #{tpu_custom_call.1} parent=27 // pred_region
          %s205 = sand.u32 %s75, 1
          %s206 = scalar_lea.sflag [#allocation9], %s205
          %s207 = sand.u32 %s75, 1
          %s208 = scalar_lea.vmem [#allocation8], %s207
          %s210 = ssub.s32 16, 16
          %211 = vsyncadd %s206, %s210
          %s212 = smul.addr %s18, 16
          %s213 = scalar_lea.hbm %s2, %s212
          %s215 = sshll.u32 %s208, 4
          %s216 = int_to_ptr.vmem [resolvable:$true] %s215
          %218 = dma.hbm_to_vmem [thread:$0]  %s213, 16, %s216, %s206
        $region36: #{tpu_custom_call.1} parent=27 // pred_fallthru
          _
      $region28: #{tpu_custom_call.1} parent=5 // pred_fallthru
        _
      %p219 = scmp.le.s32.totalorder 1, %s18
      %p220 = scmp.lt.s32.totalorder %s18, 3
      %p221 = pnand %p219, %p220
      %p222 = pneg %p221
      // Predicated region
      $region37: #{tpu_custom_call.1} parent=5 // pred_check
        _
      $region38: #{tpu_custom_call.1} parent=5 // pred_check_branch
        %224 = sbr.rel (%p221) target = $region40
      $region39: #{tpu_custom_call.1} parent=5 // pred_region
        %s225 = ssub.s32 %s18, 1
        %s226 = sand.u32 %s52, 1
        %s227 = scalar_lea.sflag [#allocation6], %s226
        %s228 = sand.u32 %s52, 1
        %s229 = smul.addr %s228, 32
        %s230 = scalar_lea.vmem [#allocation5], %s229
        // Predicated region
        $region41: #{tpu_custom_call.1} parent=39 // pred_check
          %p231 = pneg %p65
        $region42: #{tpu_custom_call.1} parent=39 // pred_check_branch
          %233 = sbr.rel (%p231) target = $region44
        $region43: #{tpu_custom_call.1} parent=39 // pred_region
          %234 = dma.done %s227, 512
        $region44: #{tpu_custom_call.1} parent=39 // pred_fallthru
          _
        %s235 = sand.u32 %s78, 1
        %s236 = scalar_lea.sflag [#allocation9], %s235
        %s237 = sand.u32 %s78, 1
        %s238 = scalar_lea.vmem [#allocation8], %s237
        // Predicated region
        $region45: #{tpu_custom_call.1} parent=39 // pred_check
          %p239 = pneg %p91
        $region46: #{tpu_custom_call.1} parent=39 // pred_check_branch
          %241 = sbr.rel (%p239) target = $region48
        $region47: #{tpu_custom_call.1} parent=39 // pred_region
          %242 = dma.done %s236, 16
        $region48: #{tpu_custom_call.1} parent=39 // pred_fallthru
          _
        %p243 = pneg %p39
        %p244 = pneg %p36
        %s245 = sand.u32 %s52, 1
        %s246 = scalar_lea.sflag [#allocation6], %s245
        %s247 = sand.u32 %s52, 1
        %s248 = smul.addr %s247, 32
        %s249 = scalar_lea.vmem [#allocation5], %s248
        %p250 = pneg %p65
        %p251 = pneg %p62
        %s252 = sand.u32 %s78, 1
        %s253 = scalar_lea.sflag [#allocation9], %s252
        %s254 = sand.u32 %s78, 1
        %s255 = scalar_lea.vmem [#allocation8], %s254
        %p256 = pneg %p91
        %p257 = pneg %p88
        %p258 = pneg %p112
        %p259 = pneg %p109
        %p260 = pneg %p133
        %p261 = pneg %p130
        %p262 = pneg %p154
        %p263 = pneg %p151
        %v265 = vld [vmem:[%s0] sm:$0xff]
        %v266 = vld [vmem:[%s0 + $0x8] sm:$0xff]
        %v267 = vld [vmem:[%s4] sm:$0xff]
        %v268 = vld [vmem:[%s4 + $0x8] sm:$0xff]
        %p269 = scmp.eq.s32.totalorder %s23, 0
        // Predicated region
        $region49: #{tpu_custom_call.1} parent=39 // pred_check
          %p270 = pneg %p269
        $region50: #{tpu_custom_call.1} parent=39 // pred_check_branch
          %272 = sbr.rel (%p270) target = $region52
        $region51: #{tpu_custom_call.1} parent=39 // pred_region
          %vm273 = vcmask 7168
          %274 = vst.msk [vmem:[#allocation2] sm:$0xff] %vm273, -inf
          %275 = vst.msk [vmem:[#allocation2 + $0x8] sm:$0xff] %vm273, -inf
          %276 = vst.msk [vmem:[#allocation3] sm:$0xff] %vm273, 0.0
          %277 = vst.msk [vmem:[#allocation3 + $0x8] sm:$0xff] %vm273, 0.0
          %278 = vst.msk [vmem:[#allocation4] sm:$0xff] %vm273, 0.0
          %279 = vst.msk [vmem:[#allocation4 + $0x8] sm:$0xff] %vm273, 0.0
          %v280 = vmul.f32 %v265, %v265
          %v281 = vmul.f32 %v266, %v266
          %vm282 = vcmask 523264
          %v283 = vsel %vm282, %v280, 0.0
          %284 = vadd.xlane.f32.xlu0 %v283
          %v285 = vpop.xlane.xlu0 %284
          %v286 = vsel %vm282, %v281, 0.0
          %287 = vadd.xlane.f32.xlu0 %v286
          %v288 = vpop.xlane.xlu0 %287
          %v289 = vrsqrt.pop %v285
          %v290 = vrsqrt.pop %v288
          %v291 = vmul.f32 %v265, %v289
          %v292 = vmul.f32 %v266, %v290
          %v294 = vsel %vm282, %v291, 0
          %v297 = vsel %vm282, %v292, 0
          %299 = vmatprep.subr.mxu0 0.0
          %300 = vmatpush1.xpose.msra.mxu0 %v297
          %301 = vmatprep.subr.mxu0 0.0
          %302 = vmatpush1.xpose.msra.mxu0 0.0
          %303 = vmatprep.subr.mxu0 0.0
          %304 = vmatpush1.xpose.msra.mxu0 0.0
          %305 = vmatprep.subr.mxu0 0.0
          %306 = vmatpush1.xpose.msra.mxu0 0.0
          %307 = vmatprep.subr.mxu0 0.0
          %308 = vmatpush1.xpose.msra.mxu0 0.0
          %309 = vmatprep.subr.mxu0 0.0
          %310 = vmatpush1.xpose.msra.mxu0 0.0
          %311 = vmatprep.subr.mxu0 0.0
          %312 = vmatpush1.xpose.msra.mxu0 0.0
          %313 = vmatprep.subr.mxu0 0.0
          %314 = vmatpush1.xpose.msra.mxu0 0.0
          %315 = vmatprep.subr.mxu0 0.0
          %316 = vmatpush1.xpose.msra.mxu0 0.0
          %317 = vmatprep.subr.mxu0 0.0
          %318 = vmatpush1.xpose.msra.mxu0 0.0
          %319 = vmatprep.subr.mxu0 0.0
          %320 = vmatpush1.xpose.msra.mxu0 0.0
          %321 = vmatprep.subr.mxu0 0.0
          %322 = vmatpush1.xpose.msra.mxu0 0.0
          %323 = vmatprep.subr.mxu0 0.0
          %324 = vmatpush1.xpose.msra.mxu0 0.0
          %325 = vmatprep.subr.mxu0 0.0
          %326 = vmatpush1.xpose.msra.mxu0 0.0
          %327 = vmatprep.subr.mxu0 0.0
          %328 = vmatpush1.xpose.msra.mxu0 0.0
          %329 = vmatprep.subr.mxu0 0.0
          %330 = vmatpush1.xpose.msra.mxu0 0.0
          %331 = vmatprep.subr.mxu0 0.0
          %332 = vmatpush1.xpose.msra.mxu0 0.0
          %333 = vmatprep.subr.mxu0 0.0
          %334 = vmatpush1.xpose.msra.mxu0 0.0
          %335 = vmatprep.subr.mxu0 0.0
          %336 = vmatpush1.xpose.msra.mxu0 0.0
          %337 = vmatprep.subr.mxu0 0.0
          %338 = vmatpush1.xpose.msra.mxu0 0.0
          %339 = vmatprep.subr.mxu0 0.0
          %340 = vmatpush1.xpose.msra.mxu0 0.0
          %341 = vmatprep.subr.mxu0 0.0
          %342 = vmatpush1.xpose.msra.mxu0 0.0
          %343 = vmatprep.subr.mxu0 0.0
          %344 = vmatpush1.xpose.msra.mxu0 0.0
          %345 = vmatprep.subr.mxu0 0.0
          %346 = vmatpush1.xpose.msra.mxu0 0.0
          %347 = vmatprep.subr.mxu0 0.0
          %348 = vmatpush1.xpose.msra.mxu0 0.0
          %349 = vmatprep.subr.mxu0 0.0
          %350 = vmatpush1.xpose.msra.mxu0 0.0
          %351 = vmatprep.subr.mxu0 0.0
          %352 = vmatpush1.xpose.msra.mxu0 0.0
          %353 = vmatprep.subr.mxu0 0.0
          %354 = vmatpush1.xpose.msra.mxu0 0.0
          %355 = vmatprep.subr.mxu0 0.0
          %356 = vmatpush1.xpose.msra.mxu0 0.0
          %357 = vmatprep.subr.mxu0 0.0
          %358 = vmatpush1.xpose.msra.mxu0 0.0
          %359 = vmatprep.subr.mxu0 0.0
          %360 = vmatpush1.xpose.msra.mxu0 0.0
          %361 = vmatprep.subr.mxu0 0.0
          %362 = vmatpush1.xpose.msra.mxu0 0.0
          %363 = vmatprep.mubr.f32.mxu0 0.0
          %364 = vmatmul.mubr.f32.gmra.mrb[0].mxu0 %v294
          %v365 = vpop.f32.mrb[0].mxu0
          %v366 = vadd.f32 0.0, %v365
          %v367 = vpop.f32.mrb[0].mxu0
          %368 = vdwg.mxu0
          %369 = vxpose.xlu0.b32.start [1/16] %v267, 128
          %370 = vxpose.xlu0.b32.cont [2/16] 0, 128
          %371 = vxpose.xlu0.b32.cont [3/16] 0, 128
          %372 = vxpose.xlu0.b32.cont [4/16] 0, 128
          %373 = vxpose.xlu0.b32.cont [5/16] 0, 128
          %374 = vxpose.xlu0.b32.cont [6/16] 0, 128
          %375 = vxpose.xlu0.b32.cont [7/16] 0, 128
          %376 = vxpose.xlu0.b32.cont [8/16] 0, 128
          %377 = vxpose.xlu0.b32.cont [9/16] 0, 128
          %378 = vxpose.xlu0.b32.cont [10/16] 0, 128
          %379 = vxpose.xlu0.b32.cont [11/16] 0, 128
          %380 = vxpose.xlu0.b32.cont [12/16] 0, 128
          %381 = vxpose.xlu0.b32.cont [13/16] 0, 128
          %382 = vxpose.xlu0.b32.cont [14/16] 0, 128
          %383 = vxpose.xlu0.b32.cont [15/16] 0, 128
          %384 = vxpose.xlu0.b32.end [16/16] 0, 128
          %v385 = vpop.trf.xlu0
          %v386 = vpop.trf.xlu0
          %v387 = vpop.trf.xlu0
          %v388 = vpop.trf.xlu0
          %v389 = vpop.trf.xlu0
          %v390 = vpop.trf.xlu0
          %v391 = vpop.trf.xlu0
          %v392 = vpop.trf.xlu0
          %v393 = vpop.trf.xlu0
          %v394 = vpop.trf.xlu0
          %v395 = vpop.trf.xlu0
          %v396 = vpop.trf.xlu0
          %v397 = vpop.trf.xlu0
          %v398 = vpop.trf.xlu0
          %v399 = vpop.trf.xlu0
          %v400 = vpop.trf.xlu0
          %401 = vset.pattern.permute.xlu0 0
          %402 = vperm.xlu0 %401, %v267
          %v403 = vpop.permute.xlu0 %402
          %v404 = vlaneseq
          %v405 = vshrl.u32 %v404, 7
          %v406 = vsub.s32 0, %v405
          %v407 = vrot.slane %v385, %v406
          %vm408 = vcmp.eq.s32.totalorder %v403, %v407
          %v409 = vsub.f32 %v366, 0.6
          %v410 = vmul.f32 %v409, -10.0
          %v411 = vsub.f32 %v366, 0.4
          %v412 = vmul.f32 %v411, 40.0
          %v413 = vsel %vm408, %v410, %v412
          %v414 = vmax.f32 %v413, 0.0
          %v415 = vand.u32 2147483647, %v413
          %v416 = vsub.f32 0.0, %v415
          %v417 = vmul.f32 %v416, 1.442695
          %v418 = vpow.pop %v417
          %v419 = vadd.f32 %v418, 1.0
          %v420 = vlog2.pop %v419
          %v421 = vmul.f32 %v420, 0.6931472
          %v422 = vmul.f32 -0.5, %v418
          %v423 = vadd.f32 %v422, 1.0
          %v424 = vmul.f32 %v423, %v418
          %v425 = vand.u32 2147483647, %v418
          %vm426 = vcmp.lt.f32.partialorder %v425, 0.0004427343
          %v427 = vsel %vm426, %v424, %v421
          %v428 = vadd.f32 %v414, %v427
          %vm429 = vcmask 64512
          %v430 = vsel %vm429, %v428, 0.0
          %431 = vadd.xlane.f32.xlu0 %v430
          %v432 = vpop.xlane.xlu0 %431
          %v433 = vrot.slane %v432, 4
          %v434 = vadd.f32 %v432, %v433
          %v435 = vrot.slane %v434, 2
          %v436 = vadd.f32 %v434, %v435
          %v437 = vrot.slane %v436, 1
          %v438 = vadd.f32 %v436, %v437
          %s439 = vtos %v438
          %s440 = smul.f32 %s439, 2.0
          %s441 = smul.f32 %s440, 0.125
          %v442 = vld [vmem:[%s3] sm:$0xff]
          %v443 = vsub.f32 %v442, 0.6
          %v444 = vmul.f32 %v443, -10.0
          %v445 = vsub.f32 %v442, 0.4
          %v446 = vmul.f32 %v445, 40.0
          %v447 = vsel %vm408, %v444, %v446
          %v448 = vmax.f32 %v447, 0.0
          %v449 = vand.u32 2147483647, %v447
          %v450 = vsub.f32 0.0, %v449
          %v451 = vmul.f32 %v450, 1.442695
          %v452 = vpow.pop %v451
          %v453 = vadd.f32 %v452, 1.0
          %v454 = vlog2.pop %v453
          %v455 = vmul.f32 %v454, 0.6931472
          %v456 = vmul.f32 -0.5, %v452
          %v457 = vadd.f32 %v456, 1.0
          %v458 = vmul.f32 %v457, %v452
          %v459 = vand.u32 2147483647, %v452
          %vm460 = vcmp.lt.f32.partialorder %v459, 0.0004427343
          %v461 = vsel %vm460, %v458, %v455
          %v462 = vadd.f32 %v448, %v461
          %v463 = vsel %vm429, %v462, 0.0
          %464 = vadd.xlane.f32.xlu0 %v463
          %v465 = vpop.xlane.xlu0 %464
          %v466 = vrot.slane %v465, 4
          %v467 = vadd.f32 %v465, %v466
          %v468 = vrot.slane %v467, 2
          %v469 = vadd.f32 %v467, %v468
          %v470 = vrot.slane %v469, 1
          %v471 = vadd.f32 %v469, %v470
          %s472 = vtos %v471
          %s473 = smul.f32 %s472, 2.0
          %s474 = smul.f32 %s473, 0.125
          %v475 = vlaneseq
          %v476 = vand.u32 %v475, 127
          %vm477 = vcmp.eq.s32.totalorder %v476, 1
          %vm478 = vcmp.eq.s32.totalorder %v476, 2
          %v479 = vstv %s474
          %v480 = vsel %vm478, %v479, 0.0
          %v481 = vstv %s441
          %v482 = vsel %vm477, %v481, %v480
          %vm483 = vcmask 16384
          %484 = vst.msk [vmem:[#allocation10] sm:$0x1] %vm483, %v482
        $region52: #{tpu_custom_call.1} parent=39 // pred_fallthru
          _
        %v485 = vpack.c.bf16 %v266, %v265
        %v486 = vld [vmem:[%s230] sm:$0xf]
        %v487 = vld [vmem:[%s230 + $0x4] sm:$0xf]
        %v488 = vld [vmem:[%s230 + $0x8] sm:$0xf]
        %v489 = vld [vmem:[%s230 + $0xc] sm:$0xf]
        %v490 = vld [vmem:[%s230 + $0x10] sm:$0xf]
        %v491 = vld [vmem:[%s230 + $0x14] sm:$0xf]
        %v492 = vld [vmem:[%s230 + $0x18] sm:$0xf]
        %v493 = vld [vmem:[%s230 + $0x1c] sm:$0xf]
        %v502 = vunpack.c.l.b16 %v486
        %v503 = vunpack.c.l.b16 %v487
        %v504 = vunpack.c.l.b16 %v488
        %v505 = vunpack.c.l.b16 %v489
        %v506 = vunpack.c.l.b16 %v490
        %v507 = vunpack.c.l.b16 %v491
        %v508 = vunpack.c.l.b16 %v492
        %v509 = vunpack.c.l.b16 %v493
        %v510 = vpack.c.b16 %v503, %v502
        %v511 = vpack.c.b16 %v505, %v504
        %v512 = vpack.c.b16 %v507, %v506
        %v513 = vpack.c.b16 %v509, %v508
        %vm518 = vcmask 523264
        %v520 = vsel %vm518, %v485, 0
        %522 = vmatprep.subr.bf16.mxu0 0
        %523 = vmatpush1.bf16.msra.mxu0 %v510
        %524 = vmatprep.subr.bf16.mxu0 0
        %525 = vmatpush1.bf16.msra.mxu0 %v511
        %526 = vmatprep.subr.bf16.mxu0 0
        %527 = vmatpush1.bf16.msra.mxu0 %v512
        %528 = vmatprep.subr.bf16.mxu0 0
        %529 = vmatpush1.bf16.msra.mxu0 %v513
        %530 = vmatprep.subr.bf16.mxu0 0
        %531 = vmatpush1.bf16.msra.mxu0 0
        %532 = vmatprep.subr.bf16.mxu0 0
        %533 = vmatpush1.bf16.msra.mxu0 0
        %534 = vmatprep.subr.bf16.mxu0 0
        %535 = vmatpush1.bf16.msra.mxu0 0
        %536 = vmatprep.subr.bf16.mxu0 0
        %537 = vmatpush1.bf16.msra.mxu0 0
        %538 = vmatprep.subr.bf16.mxu0 0
        %539 = vmatpush1.bf16.msra.mxu0 0
        %540 = vmatprep.subr.bf16.mxu0 0
        %541 = vmatpush1.bf16.msra.mxu0 0
        %542 = vmatprep.subr.bf16.mxu0 0
        %543 = vmatpush1.bf16.msra.mxu0 0
        %544 = vmatprep.subr.bf16.mxu0 0
        %545 = vmatpush1.bf16.msra.mxu0 0
        %546 = vmatprep.subr.bf16.mxu0 0
        %547 = vmatpush1.bf16.msra.mxu0 0
        %548 = vmatprep.subr.bf16.mxu0 0
        %549 = vmatpush1.bf16.msra.mxu0 0
        %550 = vmatprep.subr.bf16.mxu0 0
        %551 = vmatpush1.bf16.msra.mxu0 0
        %552 = vmatprep.subr.bf16.mxu0 0
        %553 = vmatpush1.bf16.msra.mxu0 0
        %554 = vmatprep.mubr.bf16.mxu0 0
        %555 = vmatmul.mubr.bf16.gmra.mrb[0].mxu0 %v520
        %v556 = vpop.f32.mrb[0].mxu0
        %v557 = vadd.f32 0.0, %v556
        %v558 = vpop.f32.mrb[0].mxu0
        %v559 = vpop.f32.mrb[0].mxu0
        %v560 = vadd.f32 0.0, %v559
        %v561 = vpop.f32.mrb[0].mxu0
        %562 = vdwg.mxu0
        %v563 = vld [vmem:[%s238] sm:$0x1]
        %v565 = vlaneseq
        %v566 = vshrl.u32 %v565, 7
        %v567 = vsub.s32 0, %v566
        %v568 = vrot.slane %v563, %v567
        %v570 = vmul.f32 %v557, %v568
        %v571 = vmul.f32 %v560, %v568
        %v572 = vlaneseq
        %v573 = vand.u32 %v572, 127
        %s574 = smul.u32 %s23, 128
        %v575 = vstv %s574
        %v576 = vsub.s32 %v267, %v575
        %v577 = vsub.s32 %v268, %v575
        %578 = vset.pattern.permute.xlu0 0
        %579 = vperm.xlu0 %578, %v576
        %v580 = vpop.permute.xlu0 %579
        %581 = vset.pattern.permute.xlu0 0
        %582 = vperm.xlu0 %581, %v577
        %v583 = vpop.permute.xlu0 %582
        %vm584 = vcmp.eq.s32.totalorder %v573, %v580
        %vm585 = vcmp.eq.s32.totalorder %v573, %v583
        %v586 = vld [vmem:[#allocation4] sm:$0xff]
        %v587 = vld [vmem:[#allocation4 + $0x8] sm:$0xff]
        %v588 = vsel %vm584, %v570, 0.0
        %v589 = vsel %vm585, %v571, 0.0
        %590 = vadd.xlane.f32.xlu0 %v588
        %v591 = vpop.xlane.xlu0 %590
        %592 = vadd.xlane.f32.xlu0 %v589
        %v593 = vpop.xlane.xlu0 %592
        %v594 = vadd.f32 %v586, %v591
        %v595 = vadd.f32 %v587, %v593
        %vm596 = vcmask 7168
        %597 = vst.msk [vmem:[#allocation4] sm:$0xff] %vm596, %v594
        %598 = vst.msk [vmem:[#allocation4 + $0x8] sm:$0xff] %vm596, %v595
        %v599 = vld [vmem:[#allocation2] sm:$0xff]
        %v600 = vld [vmem:[#allocation2 + $0x8] sm:$0xff]
        %601 = vmax.xlane.f32.xlu0 %v570
        %v602 = vpop.xlane.xlu0 %601
        %603 = vmax.xlane.f32.xlu0 %v571
        %v604 = vpop.xlane.xlu0 %603
        %v605 = vmax.f32 %v599, %v602
        %v606 = vmax.f32 %v600, %v604
        %v607 = vld [vmem:[#allocation3] sm:$0xff]
        %v608 = vld [vmem:[#allocation3 + $0x8] sm:$0xff]
        %v609 = vsub.f32 %v599, %v605
        %v610 = vsub.f32 %v600, %v606
        %v611 = vmul.f32 %v609, 1.442695
        %v612 = vpow.pop %v611
        %v613 = vmul.f32 %v610, 1.442695
        %v614 = vpow.pop %v613
        %v615 = vmul.f32 %v607, %v612
        %v616 = vmul.f32 %v608, %v614
        %618 = vset.pattern.permute.xlu0 0
        %619 = vperm.xlu0 %618, %v605
        %v620 = vpop.permute.xlu0 %619
        %623 = vset.pattern.permute.xlu0 0
        %624 = vperm.xlu0 %623, %v606
        %v625 = vpop.permute.xlu0 %624
        %v627 = vsub.f32 %v570, %v620
        %v628 = vsub.f32 %v571, %v625
        %v629 = vmul.f32 %v627, 1.442695
        %v630 = vpow.pop %v629
        %v631 = vmul.f32 %v628, 1.442695
        %v632 = vpow.pop %v631
        %633 = vadd.xlane.f32.xlu0 %v630
        %v634 = vpop.xlane.xlu0 %633
        %635 = vadd.xlane.f32.xlu0 %v632
        %v636 = vpop.xlane.xlu0 %635
        %v637 = vadd.f32 %v615, %v634
        %v638 = vadd.f32 %v616, %v636
        %639 = vst.msk [vmem:[#allocation3] sm:$0xff] %vm596, %v637
        %640 = vst.msk [vmem:[#allocation3 + $0x8] sm:$0xff] %vm596, %v638
        %641 = vst.msk [vmem:[#allocation2] sm:$0xff] %vm596, %v605
        %642 = vst.msk [vmem:[#allocation2 + $0x8] sm:$0xff] %vm596, %v606
        %p643 = scmp.eq.s32.totalorder %s23, 1
        // Predicated region
        $region53: #{tpu_custom_call.1} parent=39 // pred_check
          %p644 = pneg %p643
        $region54: #{tpu_custom_call.1} parent=39 // pred_check_branch
          %646 = sbr.rel (%p644) target = $region56
        $region55: #{tpu_custom_call.1} parent=39 // pred_region
          %v647 = vld [vmem:[#allocation2] sm:$0xff]
          %v648 = vld [vmem:[#allocation2 + $0x8] sm:$0xff]
          %v649 = vld [vmem:[#allocation3] sm:$0xff]
          %v650 = vld [vmem:[#allocation3 + $0x8] sm:$0xff]
          %v651 = vlog2.pop %v649
          %v652 = vmul.f32 %v651, 0.6931472
          %v653 = vlog2.pop %v650
          %v654 = vmul.f32 %v653, 0.6931472
          %v655 = vadd.f32 %v647, %v652
          %v656 = vadd.f32 %v648, %v654
          %v657 = vld [vmem:[#allocation4] sm:$0xff]
          %v658 = vld [vmem:[#allocation4 + $0x8] sm:$0xff]
          %v659 = vsub.f32 %v655, %v657
          %v660 = vsub.f32 %v656, %v658
          %v661 = vsel %vm596, %v659, 0.0
          %v662 = vsel %vm596, %v660, 0.0
          %v663 = vadd.f32 %v661, %v662
          %664 = vadd.xlane.f32.xlu0 %v663
          %v665 = vpop.xlane.xlu0 %664
          %v666 = vrot.slane %v665, 4
          %v667 = vadd.f32 %v665, %v666
          %v668 = vrot.slane %v667, 2
          %v669 = vadd.f32 %v667, %v668
          %v670 = vrot.slane %v669, 1
          %v671 = vadd.f32 %v669, %v670
          %s672 = vtos %v671
          %s673 = smul.f32 %s672, 0.125
          %vm674 = vcmp.eq.s32.totalorder %v573, 0
          %v675 = vld [vmem:[#allocation10] sm:$0x1]
          %v676 = vstv %s673
          %v677 = vsel %vm674, %v676, %v675
          %vm678 = vcmask 16384
          %679 = vst.msk [vmem:[#allocation10] sm:$0x1] %vm678, %v677
        $region56: #{tpu_custom_call.1} parent=39 // pred_fallthru
          _
        // Predicated region
        $region57: #{tpu_custom_call.1} parent=39 // pred_check
          %p680 = pneg %p151
        $region58: #{tpu_custom_call.1} parent=39 // pred_check_branch
          %682 = sbr.rel (%p680) target = $region60
        $region59: #{tpu_custom_call.1} parent=39 // pred_region
          %s684 = ssub.s32 16, 16
          %685 = vsyncadd [#allocation7], %s684
          %s687 = sshll.u32 [#allocation10], 4
          %s688 = int_to_ptr.vmem [resolvable:$true] %s687
          %690 = dma.vmem_to_hbm [thread:$0]  %s688, 16, %s5, [#allocation7]
        $region60: #{tpu_custom_call.1} parent=39 // pred_fallthru
          _
        // Predicated region
        $region61: #{tpu_custom_call.1} parent=39 // pred_check
          %p691 = pneg %p151
        $region62: #{tpu_custom_call.1} parent=39 // pred_check_branch
          %693 = sbr.rel (%p691) target = $region64
        $region63: #{tpu_custom_call.1} parent=39 // pred_region
          %694 = dma.done [#allocation7], 16
        $region64: #{tpu_custom_call.1} parent=39 // pred_fallthru
          _
      $region40: #{tpu_custom_call.1} parent=5 // pred_fallthru
        _
      %p695 = scmp.le.s32.totalorder 2, %s18
      // Predicated region
      $region65: #{tpu_custom_call.1} parent=5 // pred_check
        %p696 = pneg %p695
      $region66: #{tpu_custom_call.1} parent=5 // pred_check_branch
        %698 = sbr.rel (%p696) target = $region68
      $region67: #{tpu_custom_call.1} parent=5 // pred_region
        %s699 = ssub.s32 %s18, 2
      $region68: #{tpu_custom_call.1} parent=5 // pred_fallthru
        _
    $region6: #{tpu_custom_call.1} parent=1 // loop_footer
      %s22 = sadd.s32 1, %s18
    $region7: #{tpu_custom_call.1} parent=1 // loop_footer_branch
      %17 = sbr.rel target = $region3
    $region8: #{tpu_custom_call.1} parent=1 // loop_exit
      _
    %700 = vsyncpa [#allocation6], 1
    %s701 = scalar_lea.sflag [#allocation6], 1
    %702 = vsyncpa %s701, 1
    %703 = vsyncpa [#allocation9], 1
    %s704 = scalar_lea.sflag [#allocation9], 1
    %705 = vsyncpa %s704, 1
    %706 = vsyncpa [#allocation7], 1
    %s707 = scalar_lea.sflag [#allocation7], 1
    %708 = vsyncpa %s707, 1

</llo_original>
